<compile_context>
chip_gen: v6e
topology: v6e:2x2x1
jax: 0.10.0
libtpu: 0.0.40
codegen_flags: <defaults>
</compile_context>

<pallas_src>
import jax
import jax.numpy as jnp
from jax.experimental import pallas as pl
from jax.experimental.pallas import tpu as pltpu


def _round_up(x, m):
    return (x + m - 1) // m * m


def _largest_dividing_tile(padded_dim, granule, max_tile):
    """Largest multiple of `granule` that divides `padded_dim` and is <= max_tile."""
    best = granule
    t = granule
    limit = min(padded_dim, max_tile)
    while t <= limit:
        if padded_dim % t == 0:
            best = t
        t += granule
    return best


# ----------------------------------------------------------------------------
# Kernels
# ----------------------------------------------------------------------------

def _linear_kernel_f32(x_ref, w_ref, b_ref, o_ref):
    """f32 output: accumulate directly into the K-resident output block.

    x_ref: (tm, tk)  activation tile
    w_ref: (tk, tn)  pre-transposed weight tile (standard matmul, no transpose)
    b_ref: (1, tn)   bias tile
    o_ref: (tm, tn)  f32 output tile; block index constant over k -> resident.
    """
    k = pl.program_id(2)

    @pl.when(k == 0)
    def _init():
        o_ref[...] = jnp.broadcast_to(b_ref[...], o_ref.shape).astype(o_ref.dtype)

    o_ref[...] += jnp.dot(x_ref[...], w_ref[...],
                          preferred_element_type=jnp.float32)


def _linear_kernel_acc(x_ref, w_ref, b_ref, o_ref, acc_ref):
    """Low-precision output: f32 scratch accumulator, cast on the last K step."""
    k = pl.program_id(2)

    @pl.when(k == 0)
    def _init():
        acc_ref[...] = jnp.zeros_like(acc_ref)

    acc_ref[...] += jnp.dot(x_ref[...], w_ref[...],
                            preferred_element_type=jnp.float32)

    @pl.when(k == pl.num_programs(2) - 1)
    def _finalize():
        o_ref[...] = (acc_ref[...] + b_ref[...]).astype(o_ref.dtype)


# ----------------------------------------------------------------------------
# One-time parameter layout (keep this OUT of the per-call hot path)
# ----------------------------------------------------------------------------

def prepare_linear_params(weight, bias):
    """Transpose PyTorch-layout (out_dim, in_dim) weight to (in_dim, out_dim)
    and zero-pad K / N up to multiples of 128.  Done once per parameter set."""
    out_dim, in_dim = weight.shape
    kp = _round_up(in_dim, 128)
    np_ = _round_up(out_dim, 128)
    w_kn = jnp.pad(weight.T, ((0, kp - in_dim), (0, np_ - out_dim)))
    b_row = jnp.pad(bias.astype(jnp.float32).reshape(1, out_dim),
                    ((0, 0), (0, np_ - out_dim)))
    return w_kn, b_row


# ----------------------------------------------------------------------------
# Forward pass
# ----------------------------------------------------------------------------

def linear_apply(x, w_kn, b_row, out_dim, *, tm_max=512, tn_max=1024, tk_max=1024):
    """y = x @ W^T + b using the pre-laid-out (K, N) weight from
    prepare_linear_params.  Only the activation is (possibly) padded per call."""
    B, in_dim = x.shape
    Kp, Np = w_kn.shape
    out_dtype = x.dtype

    # Sublane granule depends on element width (f32: 8, bf16: 16, int8/fp8: 32).
    sub = {4: 8, 2: 16, 1: 32}.get(jnp.dtype(x.dtype).itemsize, 8)

    Mp = _round_up(B, sub)
    tm = _largest_dividing_tile(Mp, sub, tm_max)
    tn = _largest_dividing_tile(Np, 128, tn_max)
    tk = _largest_dividing_tile(Kp, 128, tk_max)

    # v7x has 2 TensorCores: keep at least 2 parallel (i, j) output blocks.
    if (Mp // tm) * (Np // tn) < 2:
        if tn >= 256 and (tn // 2) % 128 == 0 and Np % (tn // 2) == 0:
            tn //= 2
        elif tm >= 2 * sub and (tm // 2) % sub == 0 and Mp % (tm // 2) == 0:
            tm //= 2

    # Pad activations only: K when in_dim isn't a 128 multiple, M by < `sub` rows.
    if (Mp, Kp) != (B, in_dim):
        x = jnp.pad(x, ((0, Mp - B), (0, Kp - in_dim)))

    grid = (Mp // tm, Np // tn, Kp // tk)

    use_scratch = out_dtype != jnp.float32
    kernel = _linear_kernel_acc if use_scratch else _linear_kernel_f32
    scratch = [pltpu.VMEM((tm, tn), jnp.float32)] if use_scratch else []

    xi = jnp.dtype(x.dtype).itemsize
    wi = jnp.dtype(w_kn.dtype).itemsize
    oi = jnp.dtype(out_dtype).itemsize
    vmem_est = (2 * (tm * tk * xi + tk * tn * wi + tn * 4)
                + 2 * tm * tn * oi
                + (tm * tn * 4 if use_scratch else 0))
    vmem_limit = min(int(1.5 * vmem_est) + (16 << 20), 64 << 20)

    cost = pl.CostEstimate(
        flops=2 * Mp * Np * Kp,
        transcendentals=0,
        bytes_accessed=Mp * Kp * xi + Kp * Np * wi + Np * 4 + Mp * Np * oi,
    )

    out = pl.pallas_call(
        kernel,
        out_shape=jax.ShapeDtypeStruct((Mp, Np), out_dtype),
        grid=grid,
        in_specs=[
            pl.BlockSpec((tm, tk), lambda i, j, k: (i, k)),   # x
            pl.BlockSpec((tk, tn), lambda i, j, k: (k, j)),   # weight (K, N)
            pl.BlockSpec((1, tn), lambda i, j, k: (0, j)),    # bias row
        ],
        out_specs=pl.BlockSpec((tm, tn), lambda i, j, k: (i, j)),
        scratch_shapes=scratch,
        compiler_params=pltpu.CompilerParams(
            dimension_semantics=("parallel", "parallel", "arbitrary"),
            vmem_limit_bytes=vmem_limit,
        ),
        cost_estimate=cost,
    )(x, w_kn, b_row)

    if (Mp, Np) != (B, out_dim):
        out = out[:B, :out_dim]
    return out


def linear_forward(x, weight, bias, **kw):
    """Convenience one-shot: y = x @ weight.T + bias (torch.nn.Linear semantics).
    For repeated calls, run prepare_linear_params once and call linear_apply."""
    out_dim = weight.shape[0]
    w_kn, b_row = prepare_linear_params(weight, bias)
    return linear_apply(x, w_kn, b_row, out_dim, **kw)


def init_linear_params(key, in_dim, out_dim):
    # Matches torch.nn.Linear default init: U(-1/sqrt(in_dim), 1/sqrt(in_dim))
    kw, kb = jax.random.split(key)
    bound = 1.0 / jnp.sqrt(jnp.float32(in_dim))
    weight = jax.random.uniform(kw, (out_dim, in_dim), jnp.float32, -bound, bound)
    bias = jax.random.uniform(kb, (out_dim,), jnp.float32, -bound, bound)
    return weight, bias


if __name__ == "__main__":
    key = jax.random.PRNGKey(0)
    k1, k2, k3, k4 = jax.random.split(key, 4)

    # Case 1: small module-consistent shapes (batch=8, in_dim=32, out_dim=16),
    # runs through the Pallas kernel (single (8,128)x(128,128) block).
    b1, i1, o1 = 8, 32, 16
    x1 = jax.random.normal(k1, (b1, i1), jnp.float32)
    w1, bias1 = init_linear_params(k2, i1, o1)
    w1_kn, b1_row = prepare_linear_params(w1, bias1)        # one-time layout
    y1 = linear_apply(x1, w1_kn, b1_row, o1)
    jax.block_until_ready(y1)
    ref1 = x1 @ w1.T + bias1
    assert y1.shape == (b1, o1)
    assert jnp.allclose(y1, ref1, atol=1e-5, rtol=1e-5)

    # Case 2: larger aligned shapes -> no padding at all, tn picked as a divisor
    # of 768 (split to 384 so the parallel grid has >=2 blocks for v7x).
    b2, i2, o2 = 512, 1024, 768
    x2 = jax.random.normal(k3, (b2, i2), jnp.float32)
    w2, bias2 = init_linear_params(k4, i2, o2)
    y2 = linear_forward(x2, w2, bias2)
    jax.block_until_ready(y2)
    ref2 = x2 @ w2.T + bias2
    assert y2.shape == (b2, o2)
    assert jnp.allclose(y2, ref2, atol=1e-3, rtol=1e-3)

    # Case 3: unaligned shapes -> only K is padded per call (300 -> 384);
    # tm=200 / tn picked so M and N need no padded blocks.
    b3, i3, o3 = 200, 300, 140
    x3 = jax.random.normal(k1, (b3, i3), jnp.float32)
    w3, bias3 = init_linear_params(k2, i3, o3)
    y3 = linear_forward(x3, w3, bias3)
    jax.block_until_ready(y3)
    ref3 = x3 @ w3.T + bias3
    assert y3.shape == (b3, o3)
    assert jnp.allclose(y3, ref3, atol=1e-3, rtol=1e-3)

    print("KERNEL_OK")
</pallas_src>

<mosaic_0001>
module attributes {stable_mosaic.version = 11 : i64} {
  func.func @_linear_kernel_f32(%arg0: i32, %arg1: i32, %arg2: i32, %arg3: memref<8x128xf32, #tpu.memory_space<vmem>>, %arg4: memref<128x128xf32, #tpu.memory_space<vmem>>, %arg5: memref<1x128xf32, #tpu.memory_space<vmem>>, %arg6: memref<8x128xf32, #tpu.memory_space<vmem>>) attributes {dimension_semantics = [#tpu.dimension_semantics<parallel>, #tpu.dimension_semantics<parallel>, #tpu.dimension_semantics<arbitrary>], iteration_bounds = array<i64: 1, 1, 1>, scalar_prefetch = 0 : i64, scratch_operands = 0 : i64, tpu.core_type = #tpu.core_type<tc>, window_params = [{transform_indices = @transform_0, window_bounds = array<i64: 8, 128>}, {transform_indices = @transform_1, window_bounds = array<i64: 128, 128>}, {transform_indices = @transform_2, window_bounds = array<i64: 1, 128>}, {transform_indices = @transform_3, window_bounds = array<i64: 8, 128>}]} {
    %c0_i32 = arith.constant 0 : i32
    %0 = arith.cmpi eq, %arg2, %c0_i32 : i32
    %1 = arith.extui %0 : i1 to i32
    %c0_i32_0 = arith.constant 0 : i32
    %2 = arith.cmpi ne, %1, %c0_i32_0 : i32
    scf.if %2 {
      %c0_8 = arith.constant 0 : index
      %c0_9 = arith.constant 0 : index
      %9 = vector.load %arg5[%c0_8, %c0_9] : memref<1x128xf32, #tpu.memory_space<vmem>>, vector<1x128xf32>
      %10 = vector.shape_cast %9 : vector<1x128xf32> to vector<1x128xf32>
      %11 = vector.broadcast %10 : vector<1x128xf32> to vector<8x128xf32>
      %c0_10 = arith.constant 0 : index
      %c0_11 = arith.constant 0 : index
      %12 = vector.load %arg6[%c0_10, %c0_11] : memref<8x128xf32, #tpu.memory_space<vmem>>, vector<8x128xf32>
      tpu.vector_store %arg6[%c0_10, %c0_11], %11 {strides = array<i32>} : memref<8x128xf32, #tpu.memory_space<vmem>>, vector<8x128xf32>,
    } else {
    }
    %c0 = arith.constant 0 : index
    %c0_1 = arith.constant 0 : index
    %3 = vector.load %arg6[%c0, %c0_1] : memref<8x128xf32, #tpu.memory_space<vmem>>, vector<8x128xf32>
    %c0_2 = arith.constant 0 : index
    %c0_3 = arith.constant 0 : index
    %4 = vector.load %arg3[%c0_2, %c0_3] : memref<8x128xf32, #tpu.memory_space<vmem>>, vector<8x128xf32>
    %c0_4 = arith.constant 0 : index
    %c0_5 = arith.constant 0 : index
    %5 = vector.load %arg4[%c0_4, %c0_5] : memref<128x128xf32, #tpu.memory_space<vmem>>, vector<128x128xf32>
    %cst = arith.constant dense<0.000000e+00> : vector<8x128xf32>
    %6 = tpu.matmul %4, %5, %cst {dimension_numbers = #tpu.dot_dimension_numbers<[1], [0], [0], [1], [0, 0, 1, 1], [], []>} : vector<8x128xf32>, vector<128x128xf32>, vector<8x128xf32> -> vector<8x128xf32>
    %7 = arith.addf %3, %6 : vector<8x128xf32>
    %c0_6 = arith.constant 0 : index
    %c0_7 = arith.constant 0 : index
    %8 = vector.load %arg6[%c0_6, %c0_7] : memref<8x128xf32, #tpu.memory_space<vmem>>, vector<8x128xf32>
    tpu.vector_store %arg6[%c0_6, %c0_7], %7 {strides = array<i32>} : memref<8x128xf32, #tpu.memory_space<vmem>>, vector<8x128xf32>,
    return
  }
  func.func @transform_0(%arg0: i32, %arg1: i32, %arg2: i32) -> (i32, i32) {
    %c0_i32 = arith.constant 0 : i32
    return %arg0, %arg2 : i32, i32
  }
  func.func @transform_1(%arg0: i32, %arg1: i32, %arg2: i32) -> (i32, i32) {
    %c0_i32 = arith.constant 0 : i32
    return %arg2, %arg1 : i32, i32
  }
  func.func @transform_2(%arg0: i32, %arg1: i32, %arg2: i32) -> (i32, i32) {
    %c0_i32 = arith.constant 0 : i32
    %c0_i32_0 = arith.constant 0 : i32
    return %c0_i32, %arg1 : i32, i32
  }
  func.func @transform_3(%arg0: i32, %arg1: i32, %arg2: i32) -> (i32, i32) {
    %c0_i32 = arith.constant 0 : i32
    return %arg0, %arg1 : i32, i32
  }
}

</mosaic_0001>

<llo_original>
// kernel: tpu_custom_call.1
$region0: #{tpu_custom_call.1}
  #allocation0 [shape = 'u32[]', space=smem, size = 0x4, offset = 0x4, fixed_abs, tag = 'smem constant byte address 0x4 - core index']
  #allocation1 [shape = 'u32[144,128]{1,0:T(1,128)}', space=vmem, size = 0x12000, scoped, tag = 'internal scratch']
  %s0 = inlined_call_operand.hbm [shape: f32[8,128], index: 0, kind: input, shape index: {}]
  %s1 = inlined_call_operand.hbm [shape: f32[128,128], index: 1, kind: input, shape index: {}]
  %s2 = inlined_call_operand.vmem [shape: f32[1,128], index: 2, kind: input, shape index: {}]
  %s3 = inlined_call_operand.hbm [shape: f32[8,128], index: 3, kind: output, shape index: {}]
  %s4 = sld [smem:[#allocation0]]
  $region34: #{tpu_custom_call.1} parent=0
    _
  %s6 = ssub.s32 1, %s4
  %s7 = scalar_select 0, %s6, %s4
  $region1: #{tpu_custom_call.1} parent=0
    #allocation2 [shape = 'u8[4096]{0}', space=vmem, size = 0x1000, scoped, tag = 'input window, operand 0, single buffered']
    #allocation3 [shape = 's32[1]{0}', space=sflag, size = 0x4, scoped, tag = 'scoped memory for tpu_custom_call.1']
    #allocation4 [shape = 's32[1]{0}', space=sflag, size = 0x4, scoped, tag = 'scoped memory for tpu_custom_call.1']
    #allocation5 [shape = 'u8[65536]{0}', space=vmem, size = 0x10000, scoped, tag = 'input window, operand 1, single buffered']
    #allocation6 [shape = 's32[1]{0}', space=sflag, size = 0x4, scoped, tag = 'scoped memory for tpu_custom_call.1']
    #allocation7 [shape = 'u8[4096]{0}', space=vmem, size = 0x1000, scoped, tag = 'output window, operand 0, single buffered']
    %8 = vsyncpa [#allocation3], 0
    %9 = vsyncpa [#allocation6], 0
    %10 = vsyncpa [#allocation4], 0
    // Predicated region
    $region2: #{tpu_custom_call.1} parent=1 // pred_check
      _
    $region3: #{tpu_custom_call.1} parent=1 // pred_check_branch
      %12 = sbr.rel (0) target = $region5
    $region4: #{tpu_custom_call.1} parent=1 // pred_region
      %s14 = ssub.s32 128, 128
      %15 = vsyncadd [#allocation3], %s14
      %s17 = sshll.u32 [#allocation2], 4
      %s18 = int_to_ptr.vmem [resolvable:$true] %s17
      %20 = dma.hbm_to_vmem [thread:$0]  %s0, 128, %s18, [#allocation3]
    $region5: #{tpu_custom_call.1} parent=1 // pred_fallthru
      _
    // Predicated region
    $region6: #{tpu_custom_call.1} parent=1 // pred_check
      _
    $region7: #{tpu_custom_call.1} parent=1 // pred_check_branch
      %22 = sbr.rel (0) target = $region9
    $region8: #{tpu_custom_call.1} parent=1 // pred_region
      %s24 = ssub.s32 2048, 2048
      %25 = vsyncadd [#allocation6], %s24
      %s26 = sshll.u32 [#allocation5], 4
      %s27 = int_to_ptr.vmem [resolvable:$true] %s26
      %32 = dma.hbm_to_vmem [thread:$0]  %s1, 2048, %s27, [#allocation6], 128, 128, 8
    $region9: #{tpu_custom_call.1} parent=1 // pred_fallthru
      _
    // Predicated region
    $region10: #{tpu_custom_call.1} parent=1 // pred_check
      _
    $region11: #{tpu_custom_call.1} parent=1 // pred_check_branch
      %34 = sbr.rel (0) target = $region13
    $region12: #{tpu_custom_call.1} parent=1 // pred_region
      _
    $region13: #{tpu_custom_call.1} parent=1 // pred_fallthru
      _
    // Predicated region
    $region14: #{tpu_custom_call.1} parent=1 // pred_check
      _
    $region15: #{tpu_custom_call.1} parent=1 // pred_check_branch
      %36 = sbr.rel (0) target = $region17
    $region16: #{tpu_custom_call.1} parent=1 // pred_region
      %37 = dma.done [#allocation3], 128
    $region17: #{tpu_custom_call.1} parent=1 // pred_fallthru
      _
    // Predicated region
    $region18: #{tpu_custom_call.1} parent=1 // pred_check
      _
    $region19: #{tpu_custom_call.1} parent=1 // pred_check_branch
      %39 = sbr.rel (0) target = $region21
    $region20: #{tpu_custom_call.1} parent=1 // pred_region
      %40 = dma.done [#allocation6], 2048
    $region21: #{tpu_custom_call.1} parent=1 // pred_fallthru
      _
    %p41 = scmp.eq.s32.totalorder 0, 0
    // Predicated region
    $region22: #{tpu_custom_call.1} parent=1 // pred_check
      %p42 = pneg %p41
    $region23: #{tpu_custom_call.1} parent=1 // pred_check_branch
      %44 = sbr.rel (%p42) target = $region25
    $region24: #{tpu_custom_call.1} parent=1 // pred_region
      %v45 = vld [vmem:[%s2] sm:$0x1]
      %v47 = vlaneseq
      %v48 = vshrl.u32 %v47, 7
      %v49 = vsub.s32 0, %v48
      %v50 = vrot.slane %v45, %v49
      %52 = vst [vmem:[#allocation7] sm:$0xff] %v50
    $region25: #{tpu_custom_call.1} parent=1 // pred_fallthru
      _
    %v53 = vld [vmem:[#allocation7] sm:$0xff]
    %v54 = vld [vmem:[#allocation2] sm:$0xff]
    %v55 = vld [vmem:[#allocation5] sm:$0xff]
    %v56 = vld [vmem:[#allocation5 + $0x8] sm:$0xff]
    %v57 = vld [vmem:[#allocation5 + $0x10] sm:$0xff]
    %v58 = vld [vmem:[#allocation5 + $0x18] sm:$0xff]
    %v59 = vld [vmem:[#allocation5 + $0x20] sm:$0xff]
    %v60 = vld [vmem:[#allocation5 + $0x28] sm:$0xff]
    %v61 = vld [vmem:[#allocation5 + $0x30] sm:$0xff]
    %v62 = vld [vmem:[#allocation5 + $0x38] sm:$0xff]
    %v63 = vld [vmem:[#allocation5 + $0x40] sm:$0xff]
    %v64 = vld [vmem:[#allocation5 + $0x48] sm:$0xff]
    %v65 = vld [vmem:[#allocation5 + $0x50] sm:$0xff]
    %v66 = vld [vmem:[#allocation5 + $0x58] sm:$0xff]
    %v67 = vld [vmem:[#allocation5 + $0x60] sm:$0xff]
    %v68 = vld [vmem:[#allocation5 + $0x68] sm:$0xff]
    %v69 = vld [vmem:[#allocation5 + $0x70] sm:$0xff]
    %v70 = vld [vmem:[#allocation5 + $0x78] sm:$0xff]
    %71 = vmatprep.subr.mxu0 0.0
    %72 = vmatpush1.msra.mxu0 %v70
    %73 = vmatprep.subr.mxu0 0.0
    %74 = vmatpush1.msra.mxu0 %v69
    %75 = vmatprep.subr.mxu0 0.0
    %76 = vmatpush1.msra.mxu0 %v68
    %77 = vmatprep.subr.mxu0 0.0
    %78 = vmatpush1.msra.mxu0 %v67
    %79 = vmatprep.subr.mxu0 0.0
    %80 = vmatpush1.msra.mxu0 %v66
    %81 = vmatprep.subr.mxu0 0.0
    %82 = vmatpush1.msra.mxu0 %v65
    %83 = vmatprep.subr.mxu0 0.0
    %84 = vmatpush1.msra.mxu0 %v64
    %85 = vmatprep.subr.mxu0 0.0
    %86 = vmatpush1.msra.mxu0 %v63
    %87 = vmatprep.subr.mxu0 0.0
    %88 = vmatpush1.msra.mxu0 %v62
    %89 = vmatprep.subr.mxu0 0.0
    %90 = vmatpush1.msra.mxu0 %v61
    %91 = vmatprep.subr.mxu0 0.0
    %92 = vmatpush1.msra.mxu0 %v60
    %93 = vmatprep.subr.mxu0 0.0
    %94 = vmatpush1.msra.mxu0 %v59
    %95 = vmatprep.subr.mxu0 0.0
    %96 = vmatpush1.msra.mxu0 %v58
    %97 = vmatprep.subr.mxu0 0.0
    %98 = vmatpush1.msra.mxu0 %v57
    %99 = vmatprep.subr.mxu0 0.0
    %100 = vmatpush1.msra.mxu0 %v56
    %101 = vmatprep.subr.mxu0 0.0
    %102 = vmatpush1.msra.mxu0 %v55
    %103 = vmatprep.subr.mxu0 0.0
    %104 = vmatpush2.msra.mxu0 0.0
    %105 = vmatprep.subr.mxu0 0.0
    %106 = vmatpush2.msra.mxu0 0.0
    %107 = vmatprep.subr.mxu0 0.0
    %108 = vmatpush2.msra.mxu0 0.0
    %109 = vmatprep.subr.mxu0 0.0
    %110 = vmatpush2.msra.mxu0 0.0
    %111 = vmatprep.subr.mxu0 0.0
    %112 = vmatpush2.msra.mxu0 0.0
    %113 = vmatprep.subr.mxu0 0.0
    %114 = vmatpush2.msra.mxu0 0.0
    %115 = vmatprep.subr.mxu0 0.0
    %116 = vmatpush2.msra.mxu0 0.0
    %117 = vmatprep.subr.mxu0 0.0
    %118 = vmatpush2.msra.mxu0 0.0
    %119 = vmatprep.subr.mxu0 0.0
    %120 = vmatpush2.msra.mxu0 0.0
    %121 = vmatprep.subr.mxu0 0.0
    %122 = vmatpush2.msra.mxu0 0.0
    %123 = vmatprep.subr.mxu0 0.0
    %124 = vmatpush2.msra.mxu0 0.0
    %125 = vmatprep.subr.mxu0 0.0
    %126 = vmatpush2.msra.mxu0 0.0
    %127 = vmatprep.subr.mxu0 0.0
    %128 = vmatpush2.msra.mxu0 0.0
    %129 = vmatprep.subr.mxu0 0.0
    %130 = vmatpush2.msra.mxu0 0.0
    %131 = vmatprep.subr.mxu0 0.0
    %132 = vmatpush2.msra.mxu0 0.0
    %133 = vmatprep.subr.mxu0 0.0
    %134 = vmatpush2.msra.mxu0 0.0
    %135 = vmatprep.mubr.f32.mxu0 0.0
    %136 = vmatmul.mubr.f32.gmra.mxu0 %v54
    %v137 = vpop.f32.mrf.mxu0
    %v138 = vadd.f32 0.0, %v137
    %v139 = vpop.f32.mrf.mxu0
    %140 = vdwg.mxu0
    %v141 = vadd.f32 %v53, %v138
    %142 = vst [vmem:[#allocation7] sm:$0xff] %v141
    // Predicated region
    $region26: #{tpu_custom_call.1} parent=1 // pred_check
      _
    $region27: #{tpu_custom_call.1} parent=1 // pred_check_branch
      %144 = sbr.rel (0) target = $region29
    $region28: #{tpu_custom_call.1} parent=1 // pred_region
      %s146 = ssub.s32 128, 128
      %147 = vsyncadd [#allocation4], %s146
      %s149 = sshll.u32 [#allocation7], 4
      %s150 = int_to_ptr.vmem [resolvable:$true] %s149
      %152 = dma.vmem_to_hbm [thread:$0]  %s150, 128, %s3, [#allocation4]
    $region29: #{tpu_custom_call.1} parent=1 // pred_fallthru
      _
    // Predicated region
    $region30: #{tpu_custom_call.1} parent=1 // pred_check
      _
    $region31: #{tpu_custom_call.1} parent=1 // pred_check_branch
      %154 = sbr.rel (0) target = $region33
    $region32: #{tpu_custom_call.1} parent=1 // pred_region
      %155 = dma.done [#allocation4], 128
    $region33: #{tpu_custom_call.1} parent=1 // pred_fallthru
      _
    %156 = vsyncpa [#allocation3], 1
    %157 = vsyncpa [#allocation6], 1
    %158 = vsyncpa [#allocation4], 1

</llo_original>
